<compile_context>
chip_gen: v7x
topology: tpu7x:2x2x1
jax: 0.10.0
libtpu: 0.0.40
codegen_flags: <defaults>
</compile_context>

<pallas_src>
import jax
import jax.numpy as jnp
import numpy as np
from jax.experimental import pallas as pl
from jax.experimental.pallas import tpu as pltpu


# ----------------------------------------------------------------------------
# Small helpers
# ----------------------------------------------------------------------------
def _round_up(x, m):
    return ((x + m - 1) // m) * m


try:  # single-buffering request for grid-invariant operands (optional)
    _BUF1 = pl.Buffered(1)
except Exception:  # pragma: no cover - older/newer API
    _BUF1 = None


def _vmem_budget_bytes():
    """Physical VMEM capacity (per core); conservative 64 MiB fallback."""
    try:
        cap = int(pltpu.get_tpu_info().vmem_capacity_bytes)
        if cap > 0:
            return cap
    except Exception:
        pass
    return 64 * 1024 * 1024


def _default_tm(n):
    """256 rows for v6e/v7x (2x256 MXU), 128 for v4/v5 generations."""
    tm_target = 256
    try:
        kind = jax.devices()[0].device_kind.lower()
        if "v4" in kind or "v5" in kind or "lite" in kind:
            tm_target = 128
    except Exception:
        pass
    if n >= tm_target:
        return tm_target
    return _round_up(max(n, 16), 16)


def _pick_tk(k_pad, tm, rep_pad, budget):
    """Largest 128-aligned divisor of k_pad whose streaming buffers fit."""
    m = k_pad // 128
    best = 128
    for d in range(1, m + 1):
        if m % d:
            continue
        tk = d * 128
        need = 2 * tm * tk * 2 + 2 * tk * rep_pad * 2   # x + w6 K-tiles, bf16, dbl-buf
        if need <= budget:
            best = tk
    return best


# ----------------------------------------------------------------------------
# Pallas kernels
# ----------------------------------------------------------------------------
def box_head_resident_kernel(x_ref, w6_ref, b6_ref, w7_ref, b7_ref,
                             wcb_ref, bcb_ref, feat_ref, pred_ref):
    """All weights VMEM-resident; one fused fc6->relu->fc7->relu->[cls|bbox]
    chain per row tile (bf16 MXU operands, f32 accumulation)."""
    h6 = jnp.maximum(
        jnp.dot(x_ref[...], w6_ref[...], preferred_element_type=jnp.float32)
        + b6_ref[...], 0.0)
    h7 = jnp.maximum(
        jnp.dot(h6.astype(w7_ref.dtype), w7_ref[...],
                preferred_element_type=jnp.float32) + b7_ref[...], 0.0)
    feat_ref[...] = h7.astype(feat_ref.dtype)
    pred_ref[...] = (
        jnp.dot(h7.astype(wcb_ref.dtype), wcb_ref[...],
                preferred_element_type=jnp.float32) + bcb_ref[...]
    ).astype(pred_ref.dtype)


def box_head_stream_kernel(x_ref, w6_ref, b6_ref, w7_ref, b7_ref,
                           wcb_ref, bcb_ref, feat_ref, pred_ref, acc_ref):
    """Fallback: fc6 reduction streamed over a trailing 'arbitrary' K axis
    into an f32 VMEM accumulator; fc7 + predictor run once in the finalize
    branch.  Output index_maps are constant along k (revisited blocks)."""
    k = pl.program_id(1)

    @pl.when(k == 0)
    def _init():
        acc_ref[...] = jnp.zeros_like(acc_ref)

    acc_ref[...] += jnp.dot(x_ref[...], w6_ref[...],
                            preferred_element_type=jnp.float32)

    @pl.when(k == pl.num_programs(1) - 1)
    def _finalize():
        h6 = jnp.maximum(acc_ref[...] + b6_ref[...], 0.0)
        h7 = jnp.maximum(
            jnp.dot(h6.astype(w7_ref.dtype), w7_ref[...],
                    preferred_element_type=jnp.float32) + b7_ref[...], 0.0)
        feat_ref[...] = h7.astype(feat_ref.dtype)
        pred_ref[...] = (
            jnp.dot(h7.astype(wcb_ref.dtype), wcb_ref[...],
                    preferred_element_type=jnp.float32) + bcb_ref[...]
        ).astype(pred_ref.dtype)


# ----------------------------------------------------------------------------
# One-time parameter preparation (pad + bf16 cast hoisted off the fwd path)
# ----------------------------------------------------------------------------
def prepare_box_head_params(params, k_dim):
    w6, b6, w7, b7, wc, bc, wb, bb = params
    rep = w7.shape[1]
    n_cls = wc.shape[1]
    n_box = wb.shape[1]
    k_pad = _round_up(k_dim, 128)
    rep_pad = _round_up(rep, 128)
    out_pad = _round_up(n_cls + n_box, 128)

    def pad2(a, r, c):
        return jnp.pad(a, ((0, r - a.shape[0]), (0, c - a.shape[1])))

    return dict(
        w6=pad2(w6, k_pad, rep_pad).astype(jnp.bfloat16),
        b6=pad2(b6, 1, rep_pad).astype(jnp.float32),
        w7=pad2(w7, rep_pad, rep_pad).astype(jnp.bfloat16),
        b7=pad2(b7, 1, rep_pad).astype(jnp.float32),
        wcb=pad2(jnp.concatenate([wc, wb], axis=1),
                 rep_pad, out_pad).astype(jnp.bfloat16),
        bcb=pad2(jnp.concatenate([bc, bb], axis=1),
                 1, out_pad).astype(jnp.float32),
        dims=dict(k=k_dim, k_pad=k_pad, rep=rep, rep_pad=rep_pad,
                  n_cls=n_cls, n_box=n_box, out_pad=out_pad),
    )


# ----------------------------------------------------------------------------
# Forward wrapper
# ----------------------------------------------------------------------------
def roi_box_head_pallas(x_flat, prep, *, tm=None, feat_dtype=jnp.bfloat16):
    """x_flat: (N, K) pooled + flattened ROI features (bf16 or f32).
    prep: output of prepare_box_head_params.
    Returns (features (N, rep), class_logits (N, n_cls), box_reg (N, 4*n_cls))."""
    d = prep["dims"]
    n, k_dim = x_flat.shape
    assert k_dim == d["k"]
    k_pad, rep_pad, out_pad = d["k_pad"], d["rep_pad"], d["out_pad"]

    if tm is None:
        tm = _default_tm(n)
    n_pad = _round_up(n, tm)

    # x is padded once, already in bf16 (zero padding is exact for this head).
    x_p = jnp.pad(x_flat.astype(jnp.bfloat16),
                  ((0, n_pad - n), (0, k_pad - k_dim)))

    physical = _vmem_budget_bytes()
    budget = int(physical * 0.8)          # leave headroom for compiler scratch
    bf = 2                                # bf16 bytes
    feat_bytes = jnp.dtype(feat_dtype).itemsize
    res_copies = 1 if _BUF1 is not None else 2   # resident-block buffer count

    small_resident = res_copies * (rep_pad * rep_pad * bf            # w7
                                   + rep_pad * out_pad * bf          # [wc|wb]
                                   + 4 * (2 * rep_pad + out_pad))    # biases
    out_bufs = 2 * tm * rep_pad * feat_bytes + 2 * tm * out_pad * 4
    w6_resident = res_copies * k_pad * rep_pad * bf
    x_full_bufs = 2 * tm * k_pad * bf
    resident_need = small_resident + out_bufs + w6_resident + x_full_bufs
    use_resident = resident_need <= budget

    def run(single_buffer):
        def resident_spec(shape):
            idx = lambda *args: (0,) * len(shape)
            if single_buffer and _BUF1 is not None:
                return pl.BlockSpec(shape, idx, pipeline_mode=_BUF1)
            return pl.BlockSpec(shape, idx)

        if use_resident:
            grid = (n_pad // tm,)
            in_specs = [
                pl.BlockSpec((tm, k_pad), lambda i: (i, 0)),        # x tile
                resident_spec((k_pad, rep_pad)),                    # w6
                resident_spec((1, rep_pad)),                        # b6
                resident_spec((rep_pad, rep_pad)),                  # w7
                resident_spec((1, rep_pad)),                        # b7
                resident_spec((rep_pad, out_pad)),                  # [wc|wb]
                resident_spec((1, out_pad)),                        # [bc|bb]
            ]
            out_specs = (
                pl.BlockSpec((tm, rep_pad), lambda i: (i, 0)),
                pl.BlockSpec((tm, out_pad), lambda i: (i, 0)),
            )
            scratch = []
            kernel = box_head_resident_kernel
            dims_sem = ("parallel",)
            vmem_need = resident_need
        else:
            tk = _pick_tk(k_pad, tm, rep_pad,
                          budget - small_resident - out_bufs - tm * rep_pad * 4)
            grid = (n_pad // tm, k_pad // tk)
            in_specs = [
                pl.BlockSpec((tm, tk), lambda i, k: (i, k)),        # x tile
                pl.BlockSpec((tk, rep_pad), lambda i, k: (k, 0)),   # w6 K-tile
                resident_spec((1, rep_pad)),                        # b6
                resident_spec((rep_pad, rep_pad)),                  # w7
                resident_spec((1, rep_pad)),                        # b7
                resident_spec((rep_pad, out_pad)),                  # [wc|wb]
                resident_spec((1, out_pad)),                        # [bc|bb]
            ]
            out_specs = (
                pl.BlockSpec((tm, rep_pad), lambda i, k: (i, 0)),
                pl.BlockSpec((tm, out_pad), lambda i, k: (i, 0)),
            )
            scratch = [pltpu.VMEM((tm, rep_pad), jnp.float32)]      # fc6 acc
            kernel = box_head_stream_kernel
            dims_sem = ("parallel", "arbitrary")
            vmem_need = (small_resident + out_bufs + tm * rep_pad * 4
                         + 2 * tm * tk * bf + 2 * tk * rep_pad * bf)

        flops = 2 * n_pad * rep_pad * (k_pad + rep_pad + out_pad)
        bytes_acc = (n_pad * k_pad * bf + k_pad * rep_pad * bf
                     + rep_pad * rep_pad * bf + rep_pad * out_pad * bf
                     + 4 * (2 * rep_pad + out_pad)
                     + n_pad * rep_pad * feat_bytes + n_pad * out_pad * 4)
        cost = pl.CostEstimate(flops=int(flops), transcendentals=0,
                               bytes_accessed=int(bytes_acc))
        vmem_limit = int(min(physical - (2 << 20),
                             max(vmem_need + (8 << 20), 32 << 20)))

        return pl.pallas_call(
            kernel,
            out_shape=(
                jax.ShapeDtypeStruct((n_pad, rep_pad), feat_dtype),
                jax.ShapeDtypeStruct((n_pad, out_pad), jnp.float32),
            ),
            grid_spec=pltpu.PrefetchScalarGridSpec(
                num_scalar_prefetch=0,
                grid=grid,
                in_specs=in_specs,
                out_specs=out_specs,
                scratch_shapes=scratch),
            compiler_params=pltpu.CompilerParams(
                dimension_semantics=dims_sem,
                vmem_limit_bytes=vmem_limit),
            cost_estimate=cost,
        )(x_p, prep["w6"], prep["b6"], prep["w7"], prep["b7"],
          prep["wcb"], prep["bcb"])

    if _BUF1 is not None:
        try:
            feat_p, pred_p = run(True)
        except Exception:
            # pipeline_mode=Buffered(1) rejected by this jax/Mosaic version:
            # fall back to default double-buffered resident blocks.
            feat_p, pred_p = run(False)
    else:
        feat_p, pred_p = run(False)

    feat = feat_p[:n, :d["rep"]]
    class_logits = pred_p[:n, :d["n_cls"]]
    box_regression = pred_p[:n, d["n_cls"]:d["n_cls"] + d["n_box"]]
    return feat, class_logits, box_regression


# ----------------------------------------------------------------------------
# Plain-JAX glue: vectorized ROIAlign-style pooling (single bilinear sample per
# bin, spatial_scale=1.0).  Channels-last bf16 output so the flatten feeds the
# kernel a contiguous, lane-dense K axis with no further casts.
# ----------------------------------------------------------------------------
def roi_align(features, rois, batch_idx, resolution, spatial_scale=1.0):
    """features: (B, C, H, W) NCHW; rois: (N, 4) xyxy; batch_idx: (N,) int32.
    Returns (N, R, R, C) channels-last pooled features in bf16."""
    feats = jnp.transpose(features, (0, 2, 3, 1))              # (B, H, W, C)
    _, H, W, _ = feats.shape
    R = resolution

    box = rois * spatial_scale
    x1, y1, x2, y2 = box[:, 0], box[:, 1], box[:, 2], box[:, 3]
    roi_w = jnp.maximum(x2 - x1, 1.0)
    roi_h = jnp.maximum(y2 - y1, 1.0)
    bin_w = roi_w / R
    bin_h = roi_h / R

    centers = jnp.arange(R, dtype=jnp.float32) + 0.5           # (R,)
    xs = jnp.clip(x1[:, None] + centers[None, :] * bin_w[:, None], 0.0, W - 1.0)
    ys = jnp.clip(y1[:, None] + centers[None, :] * bin_h[:, None], 0.0, H - 1.0)

    x0 = jnp.floor(xs).astype(jnp.int32)
    y0 = jnp.floor(ys).astype(jnp.int32)
    x1i = jnp.minimum(x0 + 1, W - 1)
    y1i = jnp.minimum(y0 + 1, H - 1)
    lx = xs - x0.astype(jnp.float32)                            # (N, R)
    ly = ys - y0.astype(jnp.float32)                            # (N, R)

    b = batch_idx[:, None, None]                                # (N, 1, 1)
    Y0, Y1 = y0[:, :, None], y1i[:, :, None]                    # (N, R, 1)
    X0, X1 = x0[:, None, :], x1i[:, None, :]                    # (N, 1, R)

    v00 = feats[b, Y0, X0]                                      # (N, R, R, C)
    v01 = feats[b, Y0, X1]
    v10 = feats[b, Y1, X0]
    v11 = feats[b, Y1, X1]

    LY = ly[:, :, None, None]
    LX = lx[:, None, :, None]
    out = (v00 * (1 - LY) * (1 - LX) + v01 * (1 - LY) * LX
           + v10 * LY * (1 - LX) + v11 * LY * LX)               # (N, R, R, C)
    return out.astype(jnp.bfloat16)


# ----------------------------------------------------------------------------
# Parameter construction (deterministic synthetic init) + reference.
# ----------------------------------------------------------------------------
def make_params(key, in_dim, rep_size, num_classes):
    ks = jax.random.split(key, 4)
    w6 = jax.random.normal(ks[0], (in_dim, rep_size), jnp.float32) * 0.02
    b6 = jnp.zeros((1, rep_size), jnp.float32)
    w7 = jax.random.normal(ks[1], (rep_size, rep_size), jnp.float32) * 0.02
    b7 = jnp.zeros((1, rep_size), jnp.float32)
    wc = jax.random.normal(ks[2], (rep_size, num_classes), jnp.float32) * 0.01
    bc = jnp.zeros((1, num_classes), jnp.float32)
    wb = jax.random.normal(ks[3], (rep_size, num_classes * 4), jnp.float32) * 0.001
    bb = jnp.zeros((1, num_classes * 4), jnp.float32)
    return (w6, b6, w7, b7, wc, bc, wb, bb)


def reference_head(x_flat, params):
    """Mirrors the kernel numerics: bf16 matmul operands, f32 accumulation."""
    def bf(a):
        return a.astype(jnp.bfloat16).astype(jnp.float32)
    w6, b6, w7, b7, wc, bc, wb, bb = params
    h6 = jnp.maximum(bf(x_flat) @ bf(w6) + b6, 0.0)
    h7 = jnp.maximum(bf(h6) @ bf(w7) + b7, 0.0)
    return h7, bf(h7) @ bf(wc) + bc, bf(h7) @ bf(wb) + bb


if __name__ == "__main__":
    key = jax.random.PRNGKey(0)
    k_feat, k_box, k_param = jax.random.split(key, 3)

    # Small, module-consistent shapes.
    B, C, H, W = 2, 4, 16, 16          # feature map (NCHW)
    R = 4                              # ROIAlign pooler resolution
    REP = 32                           # representation_size (fc6/fc7 width)
    NUM_CLASSES = 8
    ROIS_PER_IMG = 8
    N = B * ROIS_PER_IMG
    K = R * R * C                      # flattened pooled feature dim

    features = jax.random.normal(k_feat, (B, C, H, W), jnp.float32)

    # Random proposal boxes (x1, y1, x2, y2) inside the feature map.
    kb1, kb2 = jax.random.split(k_box)
    xy1 = jax.random.uniform(kb1, (N, 2), minval=0.0, maxval=float(W) - 5.0)
    wh = jax.random.uniform(kb2, (N, 2), minval=2.0, maxval=5.0)
    rois = jnp.concatenate([xy1, xy1 + wh], axis=-1)
    batch_idx = jnp.repeat(jnp.arange(B, dtype=jnp.int32), ROIS_PER_IMG)

    # Glue: vectorized ROI pooling + channels-last flatten (bf16).
    pooled = roi_align(features, rois, batch_idx, R)            # (N, R, R, C)
    x_flat = pooled.reshape(N, K)                               # (N, 64) bf16

    params = make_params(k_param, K, REP, NUM_CLASSES)
    prep = prepare_box_head_params(params, K)                   # one-time prep

    feat, class_logits, box_regression = jax.block_until_ready(
        roi_box_head_pallas(x_flat, prep))

    # Sanity check vs plain-JAX reference (same bf16-operand / f32-acc numerics;
    # feat is emitted in bf16, so use a bf16-level tolerance for it).
    feat_ref, cls_ref, box_ref = reference_head(
        x_flat.astype(jnp.float32), params)
    np.testing.assert_allclose(np.asarray(feat, dtype=np.float32),
                               np.asarray(feat_ref),
                               rtol=2e-2, atol=2e-3)
    np.testing.assert_allclose(np.asarray(class_logits), np.asarray(cls_ref),
                               rtol=2e-3, atol=2e-3)
    np.testing.assert_allclose(np.asarray(box_regression), np.asarray(box_ref),
                               rtol=2e-3, atol=2e-3)
    assert feat.shape == (N, REP)
    assert class_logits.shape == (N, NUM_CLASSES)
    assert box_regression.shape == (N, NUM_CLASSES * 4)

    print("KERNEL_OK")
</pallas_src>

<mosaic_0001>
module attributes {stable_mosaic.version = 11 : i64} {
  func.func @box_head_resident_kernel(%arg0: i32, %arg1: memref<16x128xbf16, #tpu.memory_space<vmem>>, %arg2: memref<128x128xbf16, #tpu.memory_space<vmem>>, %arg3: memref<1x128xf32, #tpu.memory_space<vmem>>, %arg4: memref<128x128xbf16, #tpu.memory_space<vmem>>, %arg5: memref<1x128xf32, #tpu.memory_space<vmem>>, %arg6: memref<128x128xbf16, #tpu.memory_space<vmem>>, %arg7: memref<1x128xf32, #tpu.memory_space<vmem>>, %arg8: memref<16x128xbf16, #tpu.memory_space<vmem>>, %arg9: memref<16x128xf32, #tpu.memory_space<vmem>>) attributes {dimension_semantics = [#tpu.dimension_semantics<parallel>], iteration_bounds = array<i64: 1>, scalar_prefetch = 0 : i64, scratch_operands = 0 : i64, tpu.core_type = #tpu.core_type<tc>, window_params = [{transform_indices = @transform_0, window_bounds = array<i64: 16, 128>}, {pipeline_mode = #tpu.pipeline_mode<synchronous>, transform_indices = @transform_1, window_bounds = array<i64: 128, 128>}, {pipeline_mode = #tpu.pipeline_mode<synchronous>, transform_indices = @transform_2, window_bounds = array<i64: 1, 128>}, {pipeline_mode = #tpu.pipeline_mode<synchronous>, transform_indices = @transform_3, window_bounds = array<i64: 128, 128>}, {pipeline_mode = #tpu.pipeline_mode<synchronous>, transform_indices = @transform_4, window_bounds = array<i64: 1, 128>}, {pipeline_mode = #tpu.pipeline_mode<synchronous>, transform_indices = @transform_5, window_bounds = array<i64: 128, 128>}, {pipeline_mode = #tpu.pipeline_mode<synchronous>, transform_indices = @transform_6, window_bounds = array<i64: 1, 128>}, {transform_indices = @transform_7, window_bounds = array<i64: 16, 128>}, {transform_indices = @transform_8, window_bounds = array<i64: 16, 128>}]} {
    %c0 = arith.constant 0 : index
    %c0_0 = arith.constant 0 : index
    %0 = vector.load %arg1[%c0, %c0_0] : memref<16x128xbf16, #tpu.memory_space<vmem>>, vector<16x128xbf16>
    %c0_1 = arith.constant 0 : index
    %c0_2 = arith.constant 0 : index
    %1 = vector.load %arg2[%c0_1, %c0_2] : memref<128x128xbf16, #tpu.memory_space<vmem>>, vector<128x128xbf16>
    %cst = arith.constant dense<0.000000e+00> : vector<16x128xf32>
    %2 = tpu.matmul %0, %1, %cst {dimension_numbers = #tpu.dot_dimension_numbers<[1], [0], [0], [1], [0, 0, 1, 1], [], []>} : vector<16x128xbf16>, vector<128x128xbf16>, vector<16x128xf32> -> vector<16x128xf32>
    %c0_3 = arith.constant 0 : index
    %c0_4 = arith.constant 0 : index
    %3 = vector.load %arg3[%c0_3, %c0_4] : memref<1x128xf32, #tpu.memory_space<vmem>>, vector<1x128xf32>
    %4 = vector.broadcast %3 : vector<1x128xf32> to vector<16x128xf32>
    %5 = arith.addf %2, %4 : vector<16x128xf32>
    %cst_5 = arith.constant 0.000000e+00 : f32
    %6 = vector.broadcast %cst_5 : f32 to vector<16x128xf32>
    %7 = arith.maximumf %5, %6 : vector<16x128xf32>
    %8 = arith.truncf %7 : vector<16x128xf32> to vector<16x128xbf16>
    %c0_6 = arith.constant 0 : index
    %c0_7 = arith.constant 0 : index
    %9 = vector.load %arg4[%c0_6, %c0_7] : memref<128x128xbf16, #tpu.memory_space<vmem>>, vector<128x128xbf16>
    %cst_8 = arith.constant dense<0.000000e+00> : vector<16x128xf32>
    %10 = tpu.matmul %8, %9, %cst_8 {dimension_numbers = #tpu.dot_dimension_numbers<[1], [0], [0], [1], [0, 0, 1, 1], [], []>} : vector<16x128xbf16>, vector<128x128xbf16>, vector<16x128xf32> -> vector<16x128xf32>
    %c0_9 = arith.constant 0 : index
    %c0_10 = arith.constant 0 : index
    %11 = vector.load %arg5[%c0_9, %c0_10] : memref<1x128xf32, #tpu.memory_space<vmem>>, vector<1x128xf32>
    %12 = vector.broadcast %11 : vector<1x128xf32> to vector<16x128xf32>
    %13 = arith.addf %10, %12 : vector<16x128xf32>
    %cst_11 = arith.constant 0.000000e+00 : f32
    %14 = vector.broadcast %cst_11 : f32 to vector<16x128xf32>
    %15 = arith.maximumf %13, %14 : vector<16x128xf32>
    %16 = arith.truncf %15 : vector<16x128xf32> to vector<16x128xbf16>
    %c0_12 = arith.constant 0 : index
    %c0_13 = arith.constant 0 : index
    %17 = vector.load %arg8[%c0_12, %c0_13] : memref<16x128xbf16, #tpu.memory_space<vmem>>, vector<16x128xbf16>
    tpu.vector_store %arg8[%c0_12, %c0_13], %16 {strides = array<i32>} : memref<16x128xbf16, #tpu.memory_space<vmem>>, vector<16x128xbf16>,
    %18 = arith.truncf %15 : vector<16x128xf32> to vector<16x128xbf16>
    %c0_14 = arith.constant 0 : index
    %c0_15 = arith.constant 0 : index
    %19 = vector.load %arg6[%c0_14, %c0_15] : memref<128x128xbf16, #tpu.memory_space<vmem>>, vector<128x128xbf16>
    %cst_16 = arith.constant dense<0.000000e+00> : vector<16x128xf32>
    %20 = tpu.matmul %18, %19, %cst_16 {dimension_numbers = #tpu.dot_dimension_numbers<[1], [0], [0], [1], [0, 0, 1, 1], [], []>} : vector<16x128xbf16>, vector<128x128xbf16>, vector<16x128xf32> -> vector<16x128xf32>
    %c0_17 = arith.constant 0 : index
    %c0_18 = arith.constant 0 : index
    %21 = vector.load %arg7[%c0_17, %c0_18] : memref<1x128xf32, #tpu.memory_space<vmem>>, vector<1x128xf32>
    %22 = vector.broadcast %21 : vector<1x128xf32> to vector<16x128xf32>
    %23 = arith.addf %20, %22 : vector<16x128xf32>
    %c0_19 = arith.constant 0 : index
    %c0_20 = arith.constant 0 : index
    %24 = vector.load %arg9[%c0_19, %c0_20] : memref<16x128xf32, #tpu.memory_space<vmem>>, vector<16x128xf32>
    tpu.vector_store %arg9[%c0_19, %c0_20], %23 {strides = array<i32>} : memref<16x128xf32, #tpu.memory_space<vmem>>, vector<16x128xf32>,
    return
  }
  func.func @transform_0(%arg0: i32) -> (i32, i32) {
    %c0_i32 = arith.constant 0 : i32
    %c0_i32_0 = arith.constant 0 : i32
    return %arg0, %c0_i32 : i32, i32
  }
  func.func @transform_1(%arg0: i32) -> (i32, i32) {
    %c0_i32 = arith.constant 0 : i32
    %c0_i32_0 = arith.constant 0 : i32
    %c0_i32_1 = arith.constant 0 : i32
    return %c0_i32, %c0_i32_0 : i32, i32
  }
  func.func @transform_2(%arg0: i32) -> (i32, i32) {
    %c0_i32 = arith.constant 0 : i32
    %c0_i32_0 = arith.constant 0 : i32
    %c0_i32_1 = arith.constant 0 : i32
    return %c0_i32, %c0_i32_0 : i32, i32
  }
  func.func @transform_3(%arg0: i32) -> (i32, i32) {
    %c0_i32 = arith.constant 0 : i32
    %c0_i32_0 = arith.constant 0 : i32
    %c0_i32_1 = arith.constant 0 : i32
    return %c0_i32, %c0_i32_0 : i32, i32
  }
  func.func @transform_4(%arg0: i32) -> (i32, i32) {
    %c0_i32 = arith.constant 0 : i32
    %c0_i32_0 = arith.constant 0 : i32
    %c0_i32_1 = arith.constant 0 : i32
    return %c0_i32, %c0_i32_0 : i32, i32
  }
  func.func @transform_5(%arg0: i32) -> (i32, i32) {
    %c0_i32 = arith.constant 0 : i32
    %c0_i32_0 = arith.constant 0 : i32
    %c0_i32_1 = arith.constant 0 : i32
    return %c0_i32, %c0_i32_0 : i32, i32
  }
  func.func @transform_6(%arg0: i32) -> (i32, i32) {
    %c0_i32 = arith.constant 0 : i32
    %c0_i32_0 = arith.constant 0 : i32
    %c0_i32_1 = arith.constant 0 : i32
    return %c0_i32, %c0_i32_0 : i32, i32
  }
  func.func @transform_7(%arg0: i32) -> (i32, i32) {
    %c0_i32 = arith.constant 0 : i32
    %c0_i32_0 = arith.constant 0 : i32
    return %arg0, %c0_i32 : i32, i32
  }
  func.func @transform_8(%arg0: i32) -> (i32, i32) {
    %c0_i32 = arith.constant 0 : i32
    %c0_i32_0 = arith.constant 0 : i32
    return %arg0, %c0_i32 : i32, i32
  }
}

module attributes {stable_mosaic.version = 11 : i64} {
  func.func @box_head_resident_kernel(%arg0: i32, %arg1: memref<16x128xbf16, #tpu.memory_space<vmem>>, %arg2: memref<128x128xbf16, #tpu.memory_space<vmem>>, %arg3: memref<1x128xf32, #tpu.memory_space<vmem>>, %arg4: memref<128x128xbf16, #tpu.memory_space<vmem>>, %arg5: memref<1x128xf32, #tpu.memory_space<vmem>>, %arg6: memref<128x128xbf16, #tpu.memory_space<vmem>>, %arg7: memref<1x128xf32, #tpu.memory_space<vmem>>, %arg8: memref<16x128xbf16, #tpu.memory_space<vmem>>, %arg9: memref<16x128xf32, #tpu.memory_space<vmem>>) attributes {dimension_semantics = [#tpu.dimension_semantics<parallel>], iteration_bounds = array<i64: 1>, scalar_prefetch = 0 : i64, scratch_operands = 0 : i64, tpu.core_type = #tpu.core_type<tc>, window_params = [{transform_indices = @transform_0, window_bounds = array<i64: 16, 128>}, {pipeline_mode = #tpu.pipeline_mode<synchronous>, transform_indices = @transform_1, window_bounds = array<i64: 128, 128>}, {pipeline_mode = #tpu.pipeline_mode<synchronous>, transform_indices = @transform_2, window_bounds = array<i64: 1, 128>}, {pipeline_mode = #tpu.pipeline_mode<synchronous>, transform_indices = @transform_3, window_bounds = array<i64: 128, 128>}, {pipeline_mode = #tpu.pipeline_mode<synchronous>, transform_indices = @transform_4, window_bounds = array<i64: 1, 128>}, {pipeline_mode = #tpu.pipeline_mode<synchronous>, transform_indices = @transform_5, window_bounds = array<i64: 128, 128>}, {pipeline_mode = #tpu.pipeline_mode<synchronous>, transform_indices = @transform_6, window_bounds = array<i64: 1, 128>}, {transform_indices = @transform_7, window_bounds = array<i64: 16, 128>}, {transform_indices = @transform_8, window_bounds = array<i64: 16, 128>}]} {
    %c0 = arith.constant 0 : index
    %c0_0 = arith.constant 0 : index
    %0 = vector.load %arg1[%c0, %c0_0] : memref<16x128xbf16, #tpu.memory_space<vmem>>, vector<16x128xbf16>
    %c0_1 = arith.constant 0 : index
    %c0_2 = arith.constant 0 : index
    %1 = vector.load %arg2[%c0_1, %c0_2] : memref<128x128xbf16, #tpu.memory_space<vmem>>, vector<128x128xbf16>
    %cst = arith.constant dense<0.000000e+00> : vector<16x128xf32>
    %2 = tpu.matmul %0, %1, %cst {dimension_numbers = #tpu.dot_dimension_numbers<[1], [0], [0], [1], [0, 0, 1, 1], [], []>} : vector<16x128xbf16>, vector<128x128xbf16>, vector<16x128xf32> -> vector<16x128xf32>
    %c0_3 = arith.constant 0 : index
    %c0_4 = arith.constant 0 : index
    %3 = vector.load %arg3[%c0_3, %c0_4] : memref<1x128xf32, #tpu.memory_space<vmem>>, vector<1x128xf32>
    %4 = vector.broadcast %3 : vector<1x128xf32> to vector<16x128xf32>
    %5 = arith.addf %2, %4 : vector<16x128xf32>
    %cst_5 = arith.constant 0.000000e+00 : f32
    %6 = vector.broadcast %cst_5 : f32 to vector<16x128xf32>
    %7 = arith.maximumf %5, %6 : vector<16x128xf32>
    %8 = arith.truncf %7 : vector<16x128xf32> to vector<16x128xbf16>
    %c0_6 = arith.constant 0 : index
    %c0_7 = arith.constant 0 : index
    %9 = vector.load %arg4[%c0_6, %c0_7] : memref<128x128xbf16, #tpu.memory_space<vmem>>, vector<128x128xbf16>
    %cst_8 = arith.constant dense<0.000000e+00> : vector<16x128xf32>
    %10 = tpu.matmul %8, %9, %cst_8 {dimension_numbers = #tpu.dot_dimension_numbers<[1], [0], [0], [1], [0, 0, 1, 1], [], []>} : vector<16x128xbf16>, vector<128x128xbf16>, vector<16x128xf32> -> vector<16x128xf32>
    %c0_9 = arith.constant 0 : index
    %c0_10 = arith.constant 0 : index
    %11 = vector.load %arg5[%c0_9, %c0_10] : memref<1x128xf32, #tpu.memory_space<vmem>>, vector<1x128xf32>
    %12 = vector.broadcast %11 : vector<1x128xf32> to vector<16x128xf32>
    %13 = arith.addf %10, %12 : vector<16x128xf32>
    %cst_11 = arith.constant 0.000000e+00 : f32
    %14 = vector.broadcast %cst_11 : f32 to vector<16x128xf32>
    %15 = arith.maximumf %13, %14 : vector<16x128xf32>
    %16 = arith.truncf %15 : vector<16x128xf32> to vector<16x128xbf16>
    %c0_12 = arith.constant 0 : index
    %c0_13 = arith.constant 0 : index
    %17 = vector.load %arg8[%c0_12, %c0_13] : memref<16x128xbf16, #tpu.memory_space<vmem>>, vector<16x128xbf16>
    tpu.vector_store %arg8[%c0_12, %c0_13], %16 {strides = array<i32>} : memref<16x128xbf16, #tpu.memory_space<vmem>>, vector<16x128xbf16>,
    %18 = arith.truncf %15 : vector<16x128xf32> to vector<16x128xbf16>
    %c0_14 = arith.constant 0 : index
    %c0_15 = arith.constant 0 : index
    %19 = vector.load %arg6[%c0_14, %c0_15] : memref<128x128xbf16, #tpu.memory_space<vmem>>, vector<128x128xbf16>
    %cst_16 = arith.constant dense<0.000000e+00> : vector<16x128xf32>
    %20 = tpu.matmul %18, %19, %cst_16 {dimension_numbers = #tpu.dot_dimension_numbers<[1], [0], [0], [1], [0, 0, 1, 1], [], []>} : vector<16x128xbf16>, vector<128x128xbf16>, vector<16x128xf32> -> vector<16x128xf32>
    %c0_17 = arith.constant 0 : index
    %c0_18 = arith.constant 0 : index
    %21 = vector.load %arg7[%c0_17, %c0_18] : memref<1x128xf32, #tpu.memory_space<vmem>>, vector<1x128xf32>
    %22 = vector.broadcast %21 : vector<1x128xf32> to vector<16x128xf32>
    %23 = arith.addf %20, %22 : vector<16x128xf32>
    %c0_19 = arith.constant 0 : index
    %c0_20 = arith.constant 0 : index
    %24 = vector.load %arg9[%c0_19, %c0_20] : memref<16x128xf32, #tpu.memory_space<vmem>>, vector<16x128xf32>
    tpu.vector_store %arg9[%c0_19, %c0_20], %23 {strides = array<i32>} : memref<16x128xf32, #tpu.memory_space<vmem>>, vector<16x128xf32>,
    return
  }
  func.func @transform_0(%arg0: i32) -> (i32, i32) {
    %c0_i32 = arith.constant 0 : i32
    %c0_i32_0 = arith.constant 0 : i32
    return %arg0, %c0_i32 : i32, i32
  }
  func.func @transform_1(%arg0: i32) -> (i32, i32) {
    %c0_i32 = arith.constant 0 : i32
    %c0_i32_0 = arith.constant 0 : i32
    %c0_i32_1 = arith.constant 0 : i32
    return %c0_i32, %c0_i32_0 : i32, i32
  }
  func.func @transform_2(%arg0: i32) -> (i32, i32) {
    %c0_i32 = arith.constant 0 : i32
    %c0_i32_0 = arith.constant 0 : i32
    %c0_i32_1 = arith.constant 0 : i32
    return %c0_i32, %c0_i32_0 : i32, i32
  }
  func.func @transform_3(%arg0: i32) -> (i32, i32) {
    %c0_i32 = arith.constant 0 : i32
    %c0_i32_0 = arith.constant 0 : i32
    %c0_i32_1 = arith.constant 0 : i32
    return %c0_i32, %c0_i32_0 : i32, i32
  }
  func.func @transform_4(%arg0: i32) -> (i32, i32) {
    %c0_i32 = arith.constant 0 : i32
    %c0_i32_0 = arith.constant 0 : i32
    %c0_i32_1 = arith.constant 0 : i32
    return %c0_i32, %c0_i32_0 : i32, i32
  }
  func.func @transform_5(%arg0: i32) -> (i32, i32) {
    %c0_i32 = arith.constant 0 : i32
    %c0_i32_0 = arith.constant 0 : i32
    %c0_i32_1 = arith.constant 0 : i32
    return %c0_i32, %c0_i32_0 : i32, i32
  }
  func.func @transform_6(%arg0: i32) -> (i32, i32) {
    %c0_i32 = arith.constant 0 : i32
    %c0_i32_0 = arith.constant 0 : i32
    %c0_i32_1 = arith.constant 0 : i32
    return %c0_i32, %c0_i32_0 : i32, i32
  }
  func.func @transform_7(%arg0: i32) -> (i32, i32) {
    %c0_i32 = arith.constant 0 : i32
    %c0_i32_0 = arith.constant 0 : i32
    return %arg0, %c0_i32 : i32, i32
  }
  func.func @transform_8(%arg0: i32) -> (i32, i32) {
    %c0_i32 = arith.constant 0 : i32
    %c0_i32_0 = arith.constant 0 : i32
    return %arg0, %c0_i32 : i32, i32
  }
}

</mosaic_0001>

<llo_original>
// kernel: tpu_custom_call.1
$region0: #{tpu_custom_call.1}
  #allocation0 [shape = 'u32[]', space=smem, size = 0x4, offset = 0x4, fixed_abs, tag = 'smem constant byte address 0x4 - core index']
  #allocation1 [shape = 'u32[144,128]{1,0:T(1,128)}', space=vmem, size = 0x12000, scoped, tag = 'internal scratch']
  %s0 = inlined_call_operand.hbm [shape: bf16[16,128], index: 0, kind: input, shape index: {}]
  %s1 = inlined_call_operand.hbm [shape: bf16[128,128], index: 1, kind: input, shape index: {}]
  %s2 = inlined_call_operand.vmem [shape: f32[1,128], index: 2, kind: input, shape index: {}]
  %s3 = inlined_call_operand.hbm [shape: bf16[128,128], index: 3, kind: input, shape index: {}]
  %s4 = inlined_call_operand.vmem [shape: f32[1,128], index: 4, kind: input, shape index: {}]
  %s5 = inlined_call_operand.hbm [shape: bf16[128,128], index: 5, kind: input, shape index: {}]
  %s6 = inlined_call_operand.vmem [shape: f32[1,128], index: 6, kind: input, shape index: {}]
  %s7 = inlined_call_operand.hbm [shape: bf16[16,128], index: 7, kind: output, shape index: {0}]
  %s8 = inlined_call_operand.hbm [shape: f32[16,128], index: 8, kind: output, shape index: {1}]
  %9 = xla_tuple %s7, %s8
  %s10 = sld [smem:[#allocation0]]
  $region62: #{tpu_custom_call.1} parent=0
    _
  %s12 = ssub.s32 1, %s10
  %s13 = scalar_select 0, %s12, %s10
  $region1: #{tpu_custom_call.1} parent=0
    #allocation2 [shape = 'u8[4096]{0}', space=vmem, size = 0x1000, scoped, tag = 'input window, operand 0, single buffered']
    #allocation3 [shape = 's32[1]{0}', space=sflag, size = 0x4, scoped, tag = 'scoped memory for tpu_custom_call.1']
    #allocation4 [shape = 's32[1]{0}', space=sflag, size = 0x4, scoped, tag = 'scoped memory for tpu_custom_call.1']
    #allocation5 [shape = 'u8[32768]{0}', space=vmem, size = 0x8000, scoped, tag = 'input window, operand 1, single buffered']
    #allocation6 [shape = 's32[1]{0}', space=sflag, size = 0x4, scoped, tag = 'scoped memory for tpu_custom_call.1']
    #allocation7 [shape = 'u8[32768]{0}', space=vmem, size = 0x8000, scoped, tag = 'input window, operand 3, single buffered']
    #allocation8 [shape = 'u8[32768]{0}', space=vmem, size = 0x8000, scoped, tag = 'input window, operand 5, single buffered']
    #allocation9 [shape = 's32[1]{0}', space=sflag, size = 0x4, scoped, tag = 'scoped memory for tpu_custom_call.1']
    #allocation10 [shape = 'u8[4096]{0}', space=vmem, size = 0x1000, scoped, tag = 'output window, operand 0, single buffered']
    #allocation11 [shape = 'u8[8192]{0}', space=vmem, size = 0x2000, scoped, tag = 'output window, operand 1, single buffered']
    #allocation12 [shape = 's32[1]{0}', space=sflag, size = 0x4, scoped, tag = 'scoped memory for tpu_custom_call.1']
    %14 = vsyncpa [#allocation3], 0
    %15 = vsyncpa [#allocation6], 0
    %16 = vsyncpa [#allocation9], 0
    %17 = vsyncpa [#allocation4], 0
    %18 = vsyncpa [#allocation12], 0
    // Predicated region
    $region2: #{tpu_custom_call.1} parent=1 // pred_check
      _
    $region3: #{tpu_custom_call.1} parent=1 // pred_check_branch
      %20 = sbr.rel (0) target = $region5
    $region4: #{tpu_custom_call.1} parent=1 // pred_region
      %s22 = ssub.s32 128, 128
      %23 = vsyncadd [#allocation3], %s22
      %s24 = sshll.u32 [#allocation2], 4
      %s25 = int_to_ptr.vmem [resolvable:$true] %s24
      %30 = dma.hbm_to_vmem [thread:$0]  %s0, 128, %s25, [#allocation3], 64, 64, 4
    $region5: #{tpu_custom_call.1} parent=1 // pred_fallthru
      _
    // Predicated region
    $region6: #{tpu_custom_call.1} parent=1 // pred_check
      _
    $region7: #{tpu_custom_call.1} parent=1 // pred_check_branch
      %32 = sbr.rel (0) target = $region9
    $region8: #{tpu_custom_call.1} parent=1 // pred_region
      %s34 = ssub.s32 1024, 1024
      %35 = vsyncadd [#allocation6], %s34
      %s36 = sshll.u32 [#allocation5], 4
      %s37 = int_to_ptr.vmem [resolvable:$true] %s36
      %42 = dma.hbm_to_vmem [thread:$0]  %s1, 1024, %s37, [#allocation6], 64, 64, 4
    $region9: #{tpu_custom_call.1} parent=1 // pred_fallthru
      _
    // Predicated region
    $region10: #{tpu_custom_call.1} parent=1 // pred_check
      _
    $region11: #{tpu_custom_call.1} parent=1 // pred_check_branch
      %44 = sbr.rel (0) target = $region13
    $region12: #{tpu_custom_call.1} parent=1 // pred_region
      _
    $region13: #{tpu_custom_call.1} parent=1 // pred_fallthru
      _
    // Predicated region
    $region14: #{tpu_custom_call.1} parent=1 // pred_check
      _
    $region15: #{tpu_custom_call.1} parent=1 // pred_check_branch
      %46 = sbr.rel (0) target = $region17
    $region16: #{tpu_custom_call.1} parent=1 // pred_region
      %s48 = ssub.s32 1024, 1024
      %49 = vsyncadd [#allocation6], %s48
      %s50 = sshll.u32 [#allocation7], 4
      %s51 = int_to_ptr.vmem [resolvable:$true] %s50
      %56 = dma.hbm_to_vmem [thread:$0]  %s3, 1024, %s51, [#allocation6], 64, 64, 4
    $region17: #{tpu_custom_call.1} parent=1 // pred_fallthru
      _
    // Predicated region
    $region18: #{tpu_custom_call.1} parent=1 // pred_check
      _
    $region19: #{tpu_custom_call.1} parent=1 // pred_check_branch
      %58 = sbr.rel (0) target = $region21
    $region20: #{tpu_custom_call.1} parent=1 // pred_region
      _
    $region21: #{tpu_custom_call.1} parent=1 // pred_fallthru
      _
    // Predicated region
    $region22: #{tpu_custom_call.1} parent=1 // pred_check
      _
    $region23: #{tpu_custom_call.1} parent=1 // pred_check_branch
      %60 = sbr.rel (0) target = $region25
    $region24: #{tpu_custom_call.1} parent=1 // pred_region
      %s62 = ssub.s32 1024, 1024
      %63 = vsyncadd [#allocation9], %s62
      %s64 = sshll.u32 [#allocation8], 4
      %s65 = int_to_ptr.vmem [resolvable:$true] %s64
      %70 = dma.hbm_to_vmem [thread:$0]  %s5, 1024, %s65, [#allocation9], 64, 64, 4
    $region25: #{tpu_custom_call.1} parent=1 // pred_fallthru
      _
    // Predicated region
    $region26: #{tpu_custom_call.1} parent=1 // pred_check
      _
    $region27: #{tpu_custom_call.1} parent=1 // pred_check_branch
      %72 = sbr.rel (0) target = $region29
    $region28: #{tpu_custom_call.1} parent=1 // pred_region
      _
    $region29: #{tpu_custom_call.1} parent=1 // pred_fallthru
      _
    // Predicated region
    $region30: #{tpu_custom_call.1} parent=1 // pred_check
      _
    $region31: #{tpu_custom_call.1} parent=1 // pred_check_branch
      %74 = sbr.rel (0) target = $region33
    $region32: #{tpu_custom_call.1} parent=1 // pred_region
      %75 = dma.done [#allocation3], 128
    $region33: #{tpu_custom_call.1} parent=1 // pred_fallthru
      _
    // Predicated region
    $region34: #{tpu_custom_call.1} parent=1 // pred_check
      _
    $region35: #{tpu_custom_call.1} parent=1 // pred_check_branch
      %77 = sbr.rel (0) target = $region37
    $region36: #{tpu_custom_call.1} parent=1 // pred_region
      %78 = dma.done [#allocation6], 1024
    $region37: #{tpu_custom_call.1} parent=1 // pred_fallthru
      _
    // Predicated region
    $region38: #{tpu_custom_call.1} parent=1 // pred_check
      _
    $region39: #{tpu_custom_call.1} parent=1 // pred_check_branch
      %80 = sbr.rel (0) target = $region41
    $region40: #{tpu_custom_call.1} parent=1 // pred_region
      %81 = dma.done [#allocation6], 1024
    $region41: #{tpu_custom_call.1} parent=1 // pred_fallthru
      _
    // Predicated region
    $region42: #{tpu_custom_call.1} parent=1 // pred_check
      _
    $region43: #{tpu_custom_call.1} parent=1 // pred_check_branch
      %83 = sbr.rel (0) target = $region45
    $region44: #{tpu_custom_call.1} parent=1 // pred_region
      %84 = dma.done [#allocation9], 1024
    $region45: #{tpu_custom_call.1} parent=1 // pred_fallthru
      _
    %v86 = vld [vmem:[#allocation2] sm:$0xf]
    %v87 = vld [vmem:[#allocation2 + $0x4] sm:$0xf]
    %v88 = vld [vmem:[#allocation5] sm:$0xf]
    %v89 = vld [vmem:[#allocation5 + $0x4] sm:$0xf]
    %v90 = vld [vmem:[#allocation5 + $0x8] sm:$0xf]
    %v91 = vld [vmem:[#allocation5 + $0xc] sm:$0xf]
    %v92 = vld [vmem:[#allocation5 + $0x10] sm:$0xf]
    %v93 = vld [vmem:[#allocation5 + $0x14] sm:$0xf]
    %v94 = vld [vmem:[#allocation5 + $0x18] sm:$0xf]
    %v95 = vld [vmem:[#allocation5 + $0x1c] sm:$0xf]
    %v96 = vld [vmem:[#allocation5 + $0x20] sm:$0xf]
    %v97 = vld [vmem:[#allocation5 + $0x24] sm:$0xf]
    %v98 = vld [vmem:[#allocation5 + $0x28] sm:$0xf]
    %v99 = vld [vmem:[#allocation5 + $0x2c] sm:$0xf]
    %v100 = vld [vmem:[#allocation5 + $0x30] sm:$0xf]
    %v101 = vld [vmem:[#allocation5 + $0x34] sm:$0xf]
    %v102 = vld [vmem:[#allocation5 + $0x38] sm:$0xf]
    %v103 = vld [vmem:[#allocation5 + $0x3c] sm:$0xf]
    %v104 = vld [vmem:[%s2] sm:$0x1]
    %v106 = vlaneseq
    %v107 = vshrl.u32 %v106, 7
    %v108 = vsub.s32 0, %v107
    %v109 = vrot.slane %v104, %v108
    %v113 = vunpack.c.l.b16 %v86
    %v114 = vunpack.c.l.b16 %v87
    %v115 = vpack.c.b16 %v114, %v113
    %v133 = vunpack.c.l.b16 %v88
    %v134 = vunpack.c.l.b16 %v89
    %v135 = vunpack.c.l.b16 %v90
    %v136 = vunpack.c.l.b16 %v91
    %v137 = vunpack.c.l.b16 %v92
    %v138 = vunpack.c.l.b16 %v93
    %v139 = vunpack.c.l.b16 %v94
    %v140 = vunpack.c.l.b16 %v95
    %v141 = vunpack.c.l.b16 %v96
    %v142 = vunpack.c.l.b16 %v97
    %v143 = vunpack.c.l.b16 %v98
    %v144 = vunpack.c.l.b16 %v99
    %v145 = vunpack.c.l.b16 %v100
    %v146 = vunpack.c.l.b16 %v101
    %v147 = vunpack.c.l.b16 %v102
    %v148 = vunpack.c.l.b16 %v103
    %v149 = vpack.c.b16 %v134, %v133
    %v150 = vpack.c.b16 %v136, %v135
    %v151 = vpack.c.b16 %v138, %v137
    %v152 = vpack.c.b16 %v140, %v139
    %v153 = vpack.c.b16 %v142, %v141
    %v154 = vpack.c.b16 %v144, %v143
    %v155 = vpack.c.b16 %v146, %v145
    %v156 = vpack.c.b16 %v148, %v147
    %165 = vmatprep.subr.bf16.mxu0 0
    %166 = vmatpush1.bf16.msra.mxu0 %v149
    %167 = vmatprep.subr.bf16.mxu0 0
    %168 = vmatpush1.bf16.msra.mxu0 %v150
    %169 = vmatprep.subr.bf16.mxu0 0
    %170 = vmatpush1.bf16.msra.mxu0 %v151
    %171 = vmatprep.subr.bf16.mxu0 0
    %172 = vmatpush1.bf16.msra.mxu0 %v152
    %173 = vmatprep.subr.bf16.mxu0 0
    %174 = vmatpush1.bf16.msra.mxu0 %v153
    %175 = vmatprep.subr.bf16.mxu0 0
    %176 = vmatpush1.bf16.msra.mxu0 %v154
    %177 = vmatprep.subr.bf16.mxu0 0
    %178 = vmatpush1.bf16.msra.mxu0 %v155
    %179 = vmatprep.subr.bf16.mxu0 0
    %180 = vmatpush1.bf16.msra.mxu0 %v156
    %181 = vmatprep.subr.bf16.mxu0 0
    %182 = vmatpush1.bf16.msra.mxu0 0
    %183 = vmatprep.subr.bf16.mxu0 0
    %184 = vmatpush1.bf16.msra.mxu0 0
    %185 = vmatprep.subr.bf16.mxu0 0
    %186 = vmatpush1.bf16.msra.mxu0 0
    %187 = vmatprep.subr.bf16.mxu0 0
    %188 = vmatpush1.bf16.msra.mxu0 0
    %189 = vmatprep.subr.bf16.mxu0 0
    %190 = vmatpush1.bf16.msra.mxu0 0
    %191 = vmatprep.subr.bf16.mxu0 0
    %192 = vmatpush1.bf16.msra.mxu0 0
    %193 = vmatprep.subr.bf16.mxu0 0
    %194 = vmatpush1.bf16.msra.mxu0 0
    %195 = vmatprep.subr.bf16.mxu0 0
    %196 = vmatpush1.bf16.msra.mxu0 0
    %197 = vmatprep.mubr.bf16.mxu0 0
    %198 = vmatmul.mubr.bf16.gmra.mrb[0].mxu0 %v115
    %v199 = vpop.f32.mrb[0].mxu0
    %v200 = vadd.f32 %v109, %v199
    %v201 = vpop.f32.mrb[0].mxu0
    %v202 = vpop.f32.mrb[0].mxu0
    %v203 = vadd.f32 %v109, %v202
    %v204 = vpop.f32.mrb[0].mxu0
    %205 = vdwg.mxu0
    %v206 = vmax.f32 %v200, 0.0
    %v207 = vmax.f32 %v203, 0.0
    %v208 = vpack.c.bf16 %v207, %v206
    %v209 = vld [vmem:[#allocation7] sm:$0xf]
    %v210 = vld [vmem:[#allocation7 + $0x4] sm:$0xf]
    %v211 = vld [vmem:[#allocation7 + $0x8] sm:$0xf]
    %v212 = vld [vmem:[#allocation7 + $0xc] sm:$0xf]
    %v213 = vld [vmem:[#allocation7 + $0x10] sm:$0xf]
    %v214 = vld [vmem:[#allocation7 + $0x14] sm:$0xf]
    %v215 = vld [vmem:[#allocation7 + $0x18] sm:$0xf]
    %v216 = vld [vmem:[#allocation7 + $0x1c] sm:$0xf]
    %v217 = vld [vmem:[#allocation7 + $0x20] sm:$0xf]
    %v218 = vld [vmem:[#allocation7 + $0x24] sm:$0xf]
    %v219 = vld [vmem:[#allocation7 + $0x28] sm:$0xf]
    %v220 = vld [vmem:[#allocation7 + $0x2c] sm:$0xf]
    %v221 = vld [vmem:[#allocation7 + $0x30] sm:$0xf]
    %v222 = vld [vmem:[#allocation7 + $0x34] sm:$0xf]
    %v223 = vld [vmem:[#allocation7 + $0x38] sm:$0xf]
    %v224 = vld [vmem:[#allocation7 + $0x3c] sm:$0xf]
    %v225 = vld [vmem:[%s4] sm:$0x1]
    %v227 = vlaneseq
    %v228 = vshrl.u32 %v227, 7
    %v229 = vsub.s32 0, %v228
    %v230 = vrot.slane %v225, %v229
    %v248 = vunpack.c.l.b16 %v209
    %v249 = vunpack.c.l.b16 %v210
    %v250 = vunpack.c.l.b16 %v211
    %v251 = vunpack.c.l.b16 %v212
    %v252 = vunpack.c.l.b16 %v213
    %v253 = vunpack.c.l.b16 %v214
    %v254 = vunpack.c.l.b16 %v215
    %v255 = vunpack.c.l.b16 %v216
    %v256 = vunpack.c.l.b16 %v217
    %v257 = vunpack.c.l.b16 %v218
    %v258 = vunpack.c.l.b16 %v219
    %v259 = vunpack.c.l.b16 %v220
    %v260 = vunpack.c.l.b16 %v221
    %v261 = vunpack.c.l.b16 %v222
    %v262 = vunpack.c.l.b16 %v223
    %v263 = vunpack.c.l.b16 %v224
    %v264 = vpack.c.b16 %v249, %v248
    %v265 = vpack.c.b16 %v251, %v250
    %v266 = vpack.c.b16 %v253, %v252
    %v267 = vpack.c.b16 %v255, %v254
    %v268 = vpack.c.b16 %v257, %v256
    %v269 = vpack.c.b16 %v259, %v258
    %v270 = vpack.c.b16 %v261, %v260
    %v271 = vpack.c.b16 %v263, %v262
    %280 = vmatprep.subr.bf16.mxu0 0
    %281 = vmatpush1.bf16.msra.mxu0 %v264
    %282 = vmatprep.subr.bf16.mxu0 0
    %283 = vmatpush1.bf16.msra.mxu0 %v265
    %284 = vmatprep.subr.bf16.mxu0 0
    %285 = vmatpush1.bf16.msra.mxu0 %v266
    %286 = vmatprep.subr.bf16.mxu0 0
    %287 = vmatpush1.bf16.msra.mxu0 %v267
    %288 = vmatprep.subr.bf16.mxu0 0
    %289 = vmatpush1.bf16.msra.mxu0 %v268
    %290 = vmatprep.subr.bf16.mxu0 0
    %291 = vmatpush1.bf16.msra.mxu0 %v269
    %292 = vmatprep.subr.bf16.mxu0 0
    %293 = vmatpush1.bf16.msra.mxu0 %v270
    %294 = vmatprep.subr.bf16.mxu0 0
    %295 = vmatpush1.bf16.msra.mxu0 %v271
    %296 = vmatprep.subr.bf16.mxu0 0
    %297 = vmatpush1.bf16.msra.mxu0 0
    %298 = vmatprep.subr.bf16.mxu0 0
    %299 = vmatpush1.bf16.msra.mxu0 0
    %300 = vmatprep.subr.bf16.mxu0 0
    %301 = vmatpush1.bf16.msra.mxu0 0
    %302 = vmatprep.subr.bf16.mxu0 0
    %303 = vmatpush1.bf16.msra.mxu0 0
    %304 = vmatprep.subr.bf16.mxu0 0
    %305 = vmatpush1.bf16.msra.mxu0 0
    %306 = vmatprep.subr.bf16.mxu0 0
    %307 = vmatpush1.bf16.msra.mxu0 0
    %308 = vmatprep.subr.bf16.mxu0 0
    %309 = vmatpush1.bf16.msra.mxu0 0
    %310 = vmatprep.subr.bf16.mxu0 0
    %311 = vmatpush1.bf16.msra.mxu0 0
    %312 = vmatprep.mubr.bf16.mxu0 0
    %313 = vmatmul.mubr.bf16.gmra.mrb[0].mxu0 %v208
    %v314 = vpop.f32.mrb[0].mxu0
    %v315 = vadd.f32 %v230, %v314
    %v316 = vpop.f32.mrb[0].mxu0
    %v317 = vpop.f32.mrb[0].mxu0
    %v318 = vadd.f32 %v230, %v317
    %v319 = vpop.f32.mrb[0].mxu0
    %320 = vdwg.mxu0
    %v321 = vmax.f32 %v315, 0.0
    %v322 = vmax.f32 %v318, 0.0
    %v323 = vpack.c.bf16 %v322, %v321
    %v325 = vunpack.c.l.b16 %v323
    %v326 = vunpack.c.h.b16 %v323
    %v327 = vpack.c.b16 %v325, %v325
    %v328 = vpack.c.b16 %v326, %v326
    %331 = vst [vmem:[#allocation10] sm:$0xf] %v327
    %332 = vst [vmem:[#allocation10 + $0x4] sm:$0xf] %v328
    %v333 = vld [vmem:[#allocation8] sm:$0xf]
    %v334 = vld [vmem:[#allocation8 + $0x4] sm:$0xf]
    %v335 = vld [vmem:[#allocation8 + $0x8] sm:$0xf]
    %v336 = vld [vmem:[#allocation8 + $0xc] sm:$0xf]
    %v337 = vld [vmem:[#allocation8 + $0x10] sm:$0xf]
    %v338 = vld [vmem:[#allocation8 + $0x14] sm:$0xf]
    %v339 = vld [vmem:[#allocation8 + $0x18] sm:$0xf]
    %v340 = vld [vmem:[#allocation8 + $0x1c] sm:$0xf]
    %v341 = vld [vmem:[#allocation8 + $0x20] sm:$0xf]
    %v342 = vld [vmem:[#allocation8 + $0x24] sm:$0xf]
    %v343 = vld [vmem:[#allocation8 + $0x28] sm:$0xf]
    %v344 = vld [vmem:[#allocation8 + $0x2c] sm:$0xf]
    %v345 = vld [vmem:[#allocation8 + $0x30] sm:$0xf]
    %v346 = vld [vmem:[#allocation8 + $0x34] sm:$0xf]
    %v347 = vld [vmem:[#allocation8 + $0x38] sm:$0xf]
    %v348 = vld [vmem:[#allocation8 + $0x3c] sm:$0xf]
    %v349 = vld [vmem:[%s6] sm:$0x1]
    %v351 = vlaneseq
    %v352 = vshrl.u32 %v351, 7
    %v353 = vsub.s32 0, %v352
    %v354 = vrot.slane %v349, %v353
    %v372 = vunpack.c.l.b16 %v333
    %v373 = vunpack.c.l.b16 %v334
    %v374 = vunpack.c.l.b16 %v335
    %v375 = vunpack.c.l.b16 %v336
    %v376 = vunpack.c.l.b16 %v337
    %v377 = vunpack.c.l.b16 %v338
    %v378 = vunpack.c.l.b16 %v339
    %v379 = vunpack.c.l.b16 %v340
    %v380 = vunpack.c.l.b16 %v341
    %v381 = vunpack.c.l.b16 %v342
    %v382 = vunpack.c.l.b16 %v343
    %v383 = vunpack.c.l.b16 %v344
    %v384 = vunpack.c.l.b16 %v345
    %v385 = vunpack.c.l.b16 %v346
    %v386 = vunpack.c.l.b16 %v347
    %v387 = vunpack.c.l.b16 %v348
    %v388 = vpack.c.b16 %v373, %v372
    %v389 = vpack.c.b16 %v375, %v374
    %v390 = vpack.c.b16 %v377, %v376
    %v391 = vpack.c.b16 %v379, %v378
    %v392 = vpack.c.b16 %v381, %v380
    %v393 = vpack.c.b16 %v383, %v382
    %v394 = vpack.c.b16 %v385, %v384
    %v395 = vpack.c.b16 %v387, %v386
    %404 = vmatprep.subr.bf16.mxu0 0
    %405 = vmatpush1.bf16.msra.mxu0 %v388
    %406 = vmatprep.subr.bf16.mxu0 0
    %407 = vmatpush1.bf16.msra.mxu0 %v389
    %408 = vmatprep.subr.bf16.mxu0 0
    %409 = vmatpush1.bf16.msra.mxu0 %v390
    %410 = vmatprep.subr.bf16.mxu0 0
    %411 = vmatpush1.bf16.msra.mxu0 %v391
    %412 = vmatprep.subr.bf16.mxu0 0
    %413 = vmatpush1.bf16.msra.mxu0 %v392
    %414 = vmatprep.subr.bf16.mxu0 0
    %415 = vmatpush1.bf16.msra.mxu0 %v393
    %416 = vmatprep.subr.bf16.mxu0 0
    %417 = vmatpush1.bf16.msra.mxu0 %v394
    %418 = vmatprep.subr.bf16.mxu0 0
    %419 = vmatpush1.bf16.msra.mxu0 %v395
    %420 = vmatprep.subr.bf16.mxu0 0
    %421 = vmatpush1.bf16.msra.mxu0 0
    %422 = vmatprep.subr.bf16.mxu0 0
    %423 = vmatpush1.bf16.msra.mxu0 0
    %424 = vmatprep.subr.bf16.mxu0 0
    %425 = vmatpush1.bf16.msra.mxu0 0
    %426 = vmatprep.subr.bf16.mxu0 0
    %427 = vmatpush1.bf16.msra.mxu0 0
    %428 = vmatprep.subr.bf16.mxu0 0
    %429 = vmatpush1.bf16.msra.mxu0 0
    %430 = vmatprep.subr.bf16.mxu0 0
    %431 = vmatpush1.bf16.msra.mxu0 0
    %432 = vmatprep.subr.bf16.mxu0 0
    %433 = vmatpush1.bf16.msra.mxu0 0
    %434 = vmatprep.subr.bf16.mxu0 0
    %435 = vmatpush1.bf16.msra.mxu0 0
    %436 = vmatprep.mubr.bf16.mxu0 0
    %437 = vmatmul.mubr.bf16.gmra.mrb[0].mxu0 %v323
    %v438 = vpop.f32.mrb[0].mxu0
    %v439 = vadd.f32 %v354, %v438
    %v440 = vpop.f32.mrb[0].mxu0
    %v441 = vpop.f32.mrb[0].mxu0
    %v442 = vadd.f32 %v354, %v441
    %v443 = vpop.f32.mrb[0].mxu0
    %444 = vdwg.mxu0
    %445 = vst [vmem:[#allocation11] sm:$0xff] %v439
    %446 = vst [vmem:[#allocation11 + $0x8] sm:$0xff] %v442
    // Predicated region
    $region46: #{tpu_custom_call.1} parent=1 // pred_check
      _
    $region47: #{tpu_custom_call.1} parent=1 // pred_check_branch
      %448 = sbr.rel (0) target = $region49
    $region48: #{tpu_custom_call.1} parent=1 // pred_region
      %s450 = ssub.s32 128, 128
      %451 = vsyncadd [#allocation4], %s450
      %s452 = sshll.u32 [#allocation10], 4
      %s453 = int_to_ptr.vmem [resolvable:$true] %s452
      %458 = dma.vmem_to_hbm [thread:$0]  %s453, 128, %s7, [#allocation4], 64, 64, 4
    $region49: #{tpu_custom_call.1} parent=1 // pred_fallthru
      _
    // Predicated region
    $region50: #{tpu_custom_call.1} parent=1 // pred_check
      _
    $region51: #{tpu_custom_call.1} parent=1 // pred_check_branch
      %460 = sbr.rel (0) target = $region53
    $region52: #{tpu_custom_call.1} parent=1 // pred_region
      %s462 = ssub.s32 256, 256
      %463 = vsyncadd [#allocation12], %s462
      %s464 = sshll.u32 [#allocation11], 4
      %s465 = int_to_ptr.vmem [resolvable:$true] %s464
      %470 = dma.vmem_to_hbm [thread:$0]  %s465, 256, %s8, [#allocation12], 128, 128, 8
    $region53: #{tpu_custom_call.1} parent=1 // pred_fallthru
      _
    // Predicated region
    $region54: #{tpu_custom_call.1} parent=1 // pred_check
      _
    $region55: #{tpu_custom_call.1} parent=1 // pred_check_branch
      %472 = sbr.rel (0) target = $region57
    $region56: #{tpu_custom_call.1} parent=1 // pred_region
      %473 = dma.done [#allocation4], 128
    $region57: #{tpu_custom_call.1} parent=1 // pred_fallthru
      _
    // Predicated region
    $region58: #{tpu_custom_call.1} parent=1 // pred_check
      _
    $region59: #{tpu_custom_call.1} parent=1 // pred_check_branch
      %475 = sbr.rel (0) target = $region61
    $region60: #{tpu_custom_call.1} parent=1 // pred_region
      %476 = dma.done [#allocation12], 256
    $region61: #{tpu_custom_call.1} parent=1 // pred_fallthru
      _
    %477 = vsyncpa [#allocation3], 1
    %478 = vsyncpa [#allocation6], 1
    %479 = vsyncpa [#allocation9], 1
    %480 = vsyncpa [#allocation4], 1
    %481 = vsyncpa [#allocation12], 1

// kernel: tpu_custom_call.1
$region0: #{tpu_custom_call.1}
  #allocation0 [shape = 'u32[]', space=smem, size = 0x4, offset = 0x4, fixed_abs, tag = 'smem constant byte address 0x4 - core index']
  #allocation1 [shape = 'u32[144,128]{1,0:T(1,128)}', space=vmem, size = 0x12000, scoped, tag = 'internal scratch']
  %s0 = inlined_call_operand.hbm [shape: bf16[16,128], index: 0, kind: input, shape index: {}]
  %s1 = inlined_call_operand.hbm [shape: bf16[128,128], index: 1, kind: input, shape index: {}]
  %s2 = inlined_call_operand.vmem [shape: f32[1,128], index: 2, kind: input, shape index: {}]
  %s3 = inlined_call_operand.hbm [shape: bf16[128,128], index: 3, kind: input, shape index: {}]
  %s4 = inlined_call_operand.vmem [shape: f32[1,128], index: 4, kind: input, shape index: {}]
  %s5 = inlined_call_operand.hbm [shape: bf16[128,128], index: 5, kind: input, shape index: {}]
  %s6 = inlined_call_operand.vmem [shape: f32[1,128], index: 6, kind: input, shape index: {}]
  %s7 = inlined_call_operand.hbm [shape: bf16[16,128], index: 7, kind: output, shape index: {0}]
  %s8 = inlined_call_operand.hbm [shape: f32[16,128], index: 8, kind: output, shape index: {1}]
  %9 = xla_tuple %s7, %s8
  %s10 = sld [smem:[#allocation0]]
  $region62: #{tpu_custom_call.1} parent=0
    _
  %s12 = ssub.s32 1, %s10
  %s13 = scalar_select 0, %s12, %s10
  $region1: #{tpu_custom_call.1} parent=0
    #allocation2 [shape = 'u8[4096]{0}', space=vmem, size = 0x1000, scoped, tag = 'input window, operand 0, single buffered']
    #allocation3 [shape = 's32[1]{0}', space=sflag, size = 0x4, scoped, tag = 'scoped memory for tpu_custom_call.1']
    #allocation4 [shape = 's32[1]{0}', space=sflag, size = 0x4, scoped, tag = 'scoped memory for tpu_custom_call.1']
    #allocation5 [shape = 'u8[32768]{0}', space=vmem, size = 0x8000, scoped, tag = 'input window, operand 1, single buffered']
    #allocation6 [shape = 's32[1]{0}', space=sflag, size = 0x4, scoped, tag = 'scoped memory for tpu_custom_call.1']
    #allocation7 [shape = 'u8[32768]{0}', space=vmem, size = 0x8000, scoped, tag = 'input window, operand 3, single buffered']
    #allocation8 [shape = 'u8[32768]{0}', space=vmem, size = 0x8000, scoped, tag = 'input window, operand 5, single buffered']
    #allocation9 [shape = 's32[1]{0}', space=sflag, size = 0x4, scoped, tag = 'scoped memory for tpu_custom_call.1']
    #allocation10 [shape = 'u8[4096]{0}', space=vmem, size = 0x1000, scoped, tag = 'output window, operand 0, single buffered']
    #allocation11 [shape = 'u8[8192]{0}', space=vmem, size = 0x2000, scoped, tag = 'output window, operand 1, single buffered']
    #allocation12 [shape = 's32[1]{0}', space=sflag, size = 0x4, scoped, tag = 'scoped memory for tpu_custom_call.1']
    %14 = vsyncpa [#allocation3], 0
    %15 = vsyncpa [#allocation6], 0
    %16 = vsyncpa [#allocation9], 0
    %17 = vsyncpa [#allocation4], 0
    %18 = vsyncpa [#allocation12], 0
    // Predicated region
    $region2: #{tpu_custom_call.1} parent=1 // pred_check
      _
    $region3: #{tpu_custom_call.1} parent=1 // pred_check_branch
      %20 = sbr.rel (0) target = $region5
    $region4: #{tpu_custom_call.1} parent=1 // pred_region
      %s22 = ssub.s32 128, 128
      %23 = vsyncadd [#allocation3], %s22
      %s24 = sshll.u32 [#allocation2], 4
      %s25 = int_to_ptr.vmem [resolvable:$true] %s24
      %30 = dma.hbm_to_vmem [thread:$0]  %s0, 128, %s25, [#allocation3], 64, 64, 4
    $region5: #{tpu_custom_call.1} parent=1 // pred_fallthru
      _
    // Predicated region
    $region6: #{tpu_custom_call.1} parent=1 // pred_check
      _
    $region7: #{tpu_custom_call.1} parent=1 // pred_check_branch
      %32 = sbr.rel (0) target = $region9
    $region8: #{tpu_custom_call.1} parent=1 // pred_region
      %s34 = ssub.s32 1024, 1024
      %35 = vsyncadd [#allocation6], %s34
      %s36 = sshll.u32 [#allocation5], 4
      %s37 = int_to_ptr.vmem [resolvable:$true] %s36
      %42 = dma.hbm_to_vmem [thread:$0]  %s1, 1024, %s37, [#allocation6], 64, 64, 4
    $region9: #{tpu_custom_call.1} parent=1 // pred_fallthru
      _
    // Predicated region
    $region10: #{tpu_custom_call.1} parent=1 // pred_check
      _
    $region11: #{tpu_custom_call.1} parent=1 // pred_check_branch
      %44 = sbr.rel (0) target = $region13
    $region12: #{tpu_custom_call.1} parent=1 // pred_region
      _
    $region13: #{tpu_custom_call.1} parent=1 // pred_fallthru
      _
    // Predicated region
    $region14: #{tpu_custom_call.1} parent=1 // pred_check
      _
    $region15: #{tpu_custom_call.1} parent=1 // pred_check_branch
      %46 = sbr.rel (0) target = $region17
    $region16: #{tpu_custom_call.1} parent=1 // pred_region
      %s48 = ssub.s32 1024, 1024
      %49 = vsyncadd [#allocation6], %s48
      %s50 = sshll.u32 [#allocation7], 4
      %s51 = int_to_ptr.vmem [resolvable:$true] %s50
      %56 = dma.hbm_to_vmem [thread:$0]  %s3, 1024, %s51, [#allocation6], 64, 64, 4
    $region17: #{tpu_custom_call.1} parent=1 // pred_fallthru
      _
    // Predicated region
    $region18: #{tpu_custom_call.1} parent=1 // pred_check
      _
    $region19: #{tpu_custom_call.1} parent=1 // pred_check_branch
      %58 = sbr.rel (0) target = $region21
    $region20: #{tpu_custom_call.1} parent=1 // pred_region
      _
    $region21: #{tpu_custom_call.1} parent=1 // pred_fallthru
      _
    // Predicated region
    $region22: #{tpu_custom_call.1} parent=1 // pred_check
      _
    $region23: #{tpu_custom_call.1} parent=1 // pred_check_branch
      %60 = sbr.rel (0) target = $region25
    $region24: #{tpu_custom_call.1} parent=1 // pred_region
      %s62 = ssub.s32 1024, 1024
      %63 = vsyncadd [#allocation9], %s62
      %s64 = sshll.u32 [#allocation8], 4
      %s65 = int_to_ptr.vmem [resolvable:$true] %s64
      %70 = dma.hbm_to_vmem [thread:$0]  %s5, 1024, %s65, [#allocation9], 64, 64, 4
    $region25: #{tpu_custom_call.1} parent=1 // pred_fallthru
      _
    // Predicated region
    $region26: #{tpu_custom_call.1} parent=1 // pred_check
      _
    $region27: #{tpu_custom_call.1} parent=1 // pred_check_branch
      %72 = sbr.rel (0) target = $region29
    $region28: #{tpu_custom_call.1} parent=1 // pred_region
      _
    $region29: #{tpu_custom_call.1} parent=1 // pred_fallthru
      _
    // Predicated region
    $region30: #{tpu_custom_call.1} parent=1 // pred_check
      _
    $region31: #{tpu_custom_call.1} parent=1 // pred_check_branch
      %74 = sbr.rel (0) target = $region33
    $region32: #{tpu_custom_call.1} parent=1 // pred_region
      %75 = dma.done [#allocation3], 128
    $region33: #{tpu_custom_call.1} parent=1 // pred_fallthru
      _
    // Predicated region
    $region34: #{tpu_custom_call.1} parent=1 // pred_check
      _
    $region35: #{tpu_custom_call.1} parent=1 // pred_check_branch
      %77 = sbr.rel (0) target = $region37
    $region36: #{tpu_custom_call.1} parent=1 // pred_region
      %78 = dma.done [#allocation6], 1024
    $region37: #{tpu_custom_call.1} parent=1 // pred_fallthru
      _
    // Predicated region
    $region38: #{tpu_custom_call.1} parent=1 // pred_check
      _
    $region39: #{tpu_custom_call.1} parent=1 // pred_check_branch
      %80 = sbr.rel (0) target = $region41
    $region40: #{tpu_custom_call.1} parent=1 // pred_region
      %81 = dma.done [#allocation6], 1024
    $region41: #{tpu_custom_call.1} parent=1 // pred_fallthru
      _
    // Predicated region
    $region42: #{tpu_custom_call.1} parent=1 // pred_check
      _
    $region43: #{tpu_custom_call.1} parent=1 // pred_check_branch
      %83 = sbr.rel (0) target = $region45
    $region44: #{tpu_custom_call.1} parent=1 // pred_region
      %84 = dma.done [#allocation9], 1024
    $region45: #{tpu_custom_call.1} parent=1 // pred_fallthru
      _
    %v86 = vld [vmem:[#allocation2] sm:$0xf]
    %v87 = vld [vmem:[#allocation2 + $0x4] sm:$0xf]
    %v88 = vld [vmem:[#allocation5] sm:$0xf]
    %v89 = vld [vmem:[#allocation5 + $0x4] sm:$0xf]
    %v90 = vld [vmem:[#allocation5 + $0x8] sm:$0xf]
    %v91 = vld [vmem:[#allocation5 + $0xc] sm:$0xf]
    %v92 = vld [vmem:[#allocation5 + $0x10] sm:$0xf]
    %v93 = vld [vmem:[#allocation5 + $0x14] sm:$0xf]
    %v94 = vld [vmem:[#allocation5 + $0x18] sm:$0xf]
    %v95 = vld [vmem:[#allocation5 + $0x1c] sm:$0xf]
    %v96 = vld [vmem:[#allocation5 + $0x20] sm:$0xf]
    %v97 = vld [vmem:[#allocation5 + $0x24] sm:$0xf]
    %v98 = vld [vmem:[#allocation5 + $0x28] sm:$0xf]
    %v99 = vld [vmem:[#allocation5 + $0x2c] sm:$0xf]
    %v100 = vld [vmem:[#allocation5 + $0x30] sm:$0xf]
    %v101 = vld [vmem:[#allocation5 + $0x34] sm:$0xf]
    %v102 = vld [vmem:[#allocation5 + $0x38] sm:$0xf]
    %v103 = vld [vmem:[#allocation5 + $0x3c] sm:$0xf]
    %v104 = vld [vmem:[%s2] sm:$0x1]
    %v106 = vlaneseq
    %v107 = vshrl.u32 %v106, 7
    %v108 = vsub.s32 0, %v107
    %v109 = vrot.slane %v104, %v108
    %v113 = vunpack.c.l.b16 %v86
    %v114 = vunpack.c.l.b16 %v87
    %v115 = vpack.c.b16 %v114, %v113
    %v133 = vunpack.c.l.b16 %v88
    %v134 = vunpack.c.l.b16 %v89
    %v135 = vunpack.c.l.b16 %v90
    %v136 = vunpack.c.l.b16 %v91
    %v137 = vunpack.c.l.b16 %v92
    %v138 = vunpack.c.l.b16 %v93
    %v139 = vunpack.c.l.b16 %v94
    %v140 = vunpack.c.l.b16 %v95
    %v141 = vunpack.c.l.b16 %v96
    %v142 = vunpack.c.l.b16 %v97
    %v143 = vunpack.c.l.b16 %v98
    %v144 = vunpack.c.l.b16 %v99
    %v145 = vunpack.c.l.b16 %v100
    %v146 = vunpack.c.l.b16 %v101
    %v147 = vunpack.c.l.b16 %v102
    %v148 = vunpack.c.l.b16 %v103
    %v149 = vpack.c.b16 %v134, %v133
    %v150 = vpack.c.b16 %v136, %v135
    %v151 = vpack.c.b16 %v138, %v137
    %v152 = vpack.c.b16 %v140, %v139
    %v153 = vpack.c.b16 %v142, %v141
    %v154 = vpack.c.b16 %v144, %v143
    %v155 = vpack.c.b16 %v146, %v145
    %v156 = vpack.c.b16 %v148, %v147
    %165 = vmatprep.subr.bf16.mxu0 0
    %166 = vmatpush1.bf16.msra.mxu0 %v149
    %167 = vmatprep.subr.bf16.mxu0 0
    %168 = vmatpush1.bf16.msra.mxu0 %v150
    %169 = vmatprep.subr.bf16.mxu0 0
    %170 = vmatpush1.bf16.msra.mxu0 %v151
    %171 = vmatprep.subr.bf16.mxu0 0
    %172 = vmatpush1.bf16.msra.mxu0 %v152
    %173 = vmatprep.subr.bf16.mxu0 0
    %174 = vmatpush1.bf16.msra.mxu0 %v153
    %175 = vmatprep.subr.bf16.mxu0 0
    %176 = vmatpush1.bf16.msra.mxu0 %v154
    %177 = vmatprep.subr.bf16.mxu0 0
    %178 = vmatpush1.bf16.msra.mxu0 %v155
    %179 = vmatprep.subr.bf16.mxu0 0
    %180 = vmatpush1.bf16.msra.mxu0 %v156
    %181 = vmatprep.subr.bf16.mxu0 0
    %182 = vmatpush1.bf16.msra.mxu0 0
    %183 = vmatprep.subr.bf16.mxu0 0
    %184 = vmatpush1.bf16.msra.mxu0 0
    %185 = vmatprep.subr.bf16.mxu0 0
    %186 = vmatpush1.bf16.msra.mxu0 0
    %187 = vmatprep.subr.bf16.mxu0 0
    %188 = vmatpush1.bf16.msra.mxu0 0
    %189 = vmatprep.subr.bf16.mxu0 0
    %190 = vmatpush1.bf16.msra.mxu0 0
    %191 = vmatprep.subr.bf16.mxu0 0
    %192 = vmatpush1.bf16.msra.mxu0 0
    %193 = vmatprep.subr.bf16.mxu0 0
    %194 = vmatpush1.bf16.msra.mxu0 0
    %195 = vmatprep.subr.bf16.mxu0 0
    %196 = vmatpush1.bf16.msra.mxu0 0
    %197 = vmatprep.mubr.bf16.mxu0 0
    %198 = vmatmul.mubr.bf16.gmra.mrb[0].mxu0 %v115
    %v199 = vpop.f32.mrb[0].mxu0
    %v200 = vadd.f32 %v109, %v199
    %v201 = vpop.f32.mrb[0].mxu0
    %v202 = vpop.f32.mrb[0].mxu0
    %v203 = vadd.f32 %v109, %v202
    %v204 = vpop.f32.mrb[0].mxu0
    %205 = vdwg.mxu0
    %v206 = vmax.f32 %v200, 0.0
    %v207 = vmax.f32 %v203, 0.0
    %v208 = vpack.c.bf16 %v207, %v206
    %v209 = vld [vmem:[#allocation7] sm:$0xf]
    %v210 = vld [vmem:[#allocation7 + $0x4] sm:$0xf]
    %v211 = vld [vmem:[#allocation7 + $0x8] sm:$0xf]
    %v212 = vld [vmem:[#allocation7 + $0xc] sm:$0xf]
    %v213 = vld [vmem:[#allocation7 + $0x10] sm:$0xf]
    %v214 = vld [vmem:[#allocation7 + $0x14] sm:$0xf]
    %v215 = vld [vmem:[#allocation7 + $0x18] sm:$0xf]
    %v216 = vld [vmem:[#allocation7 + $0x1c] sm:$0xf]
    %v217 = vld [vmem:[#allocation7 + $0x20] sm:$0xf]
    %v218 = vld [vmem:[#allocation7 + $0x24] sm:$0xf]
    %v219 = vld [vmem:[#allocation7 + $0x28] sm:$0xf]
    %v220 = vld [vmem:[#allocation7 + $0x2c] sm:$0xf]
    %v221 = vld [vmem:[#allocation7 + $0x30] sm:$0xf]
    %v222 = vld [vmem:[#allocation7 + $0x34] sm:$0xf]
    %v223 = vld [vmem:[#allocation7 + $0x38] sm:$0xf]
    %v224 = vld [vmem:[#allocation7 + $0x3c] sm:$0xf]
    %v225 = vld [vmem:[%s4] sm:$0x1]
    %v227 = vlaneseq
    %v228 = vshrl.u32 %v227, 7
    %v229 = vsub.s32 0, %v228
    %v230 = vrot.slane %v225, %v229
    %v248 = vunpack.c.l.b16 %v209
    %v249 = vunpack.c.l.b16 %v210
    %v250 = vunpack.c.l.b16 %v211
    %v251 = vunpack.c.l.b16 %v212
    %v252 = vunpack.c.l.b16 %v213
    %v253 = vunpack.c.l.b16 %v214
    %v254 = vunpack.c.l.b16 %v215
    %v255 = vunpack.c.l.b16 %v216
    %v256 = vunpack.c.l.b16 %v217
    %v257 = vunpack.c.l.b16 %v218
    %v258 = vunpack.c.l.b16 %v219
    %v259 = vunpack.c.l.b16 %v220
    %v260 = vunpack.c.l.b16 %v221
    %v261 = vunpack.c.l.b16 %v222
    %v262 = vunpack.c.l.b16 %v223
    %v263 = vunpack.c.l.b16 %v224
    %v264 = vpack.c.b16 %v249, %v248
    %v265 = vpack.c.b16 %v251, %v250
    %v266 = vpack.c.b16 %v253, %v252
    %v267 = vpack.c.b16 %v255, %v254
    %v268 = vpack.c.b16 %v257, %v256
    %v269 = vpack.c.b16 %v259, %v258
    %v270 = vpack.c.b16 %v261, %v260
    %v271 = vpack.c.b16 %v263, %v262
    %280 = vmatprep.subr.bf16.mxu0 0
    %281 = vmatpush1.bf16.msra.mxu0 %v264
    %282 = vmatprep.subr.bf16.mxu0 0
    %283 = vmatpush1.bf16.msra.mxu0 %v265
    %284 = vmatprep.subr.bf16.mxu0 0
    %285 = vmatpush1.bf16.msra.mxu0 %v266
    %286 = vmatprep.subr.bf16.mxu0 0
    %287 = vmatpush1.bf16.msra.mxu0 %v267
    %288 = vmatprep.subr.bf16.mxu0 0
    %289 = vmatpush1.bf16.msra.mxu0 %v268
    %290 = vmatprep.subr.bf16.mxu0 0
    %291 = vmatpush1.bf16.msra.mxu0 %v269
    %292 = vmatprep.subr.bf16.mxu0 0
    %293 = vmatpush1.bf16.msra.mxu0 %v270
    %294 = vmatprep.subr.bf16.mxu0 0
    %295 = vmatpush1.bf16.msra.mxu0 %v271
    %296 = vmatprep.subr.bf16.mxu0 0
    %297 = vmatpush1.bf16.msra.mxu0 0
    %298 = vmatprep.subr.bf16.mxu0 0
    %299 = vmatpush1.bf16.msra.mxu0 0
    %300 = vmatprep.subr.bf16.mxu0 0
    %301 = vmatpush1.bf16.msra.mxu0 0
    %302 = vmatprep.subr.bf16.mxu0 0
    %303 = vmatpush1.bf16.msra.mxu0 0
    %304 = vmatprep.subr.bf16.mxu0 0
    %305 = vmatpush1.bf16.msra.mxu0 0
    %306 = vmatprep.subr.bf16.mxu0 0
    %307 = vmatpush1.bf16.msra.mxu0 0
    %308 = vmatprep.subr.bf16.mxu0 0
    %309 = vmatpush1.bf16.msra.mxu0 0
    %310 = vmatprep.subr.bf16.mxu0 0
    %311 = vmatpush1.bf16.msra.mxu0 0
    %312 = vmatprep.mubr.bf16.mxu0 0
    %313 = vmatmul.mubr.bf16.gmra.mrb[0].mxu0 %v208
    %v314 = vpop.f32.mrb[0].mxu0
    %v315 = vadd.f32 %v230, %v314
    %v316 = vpop.f32.mrb[0].mxu0
    %v317 = vpop.f32.mrb[0].mxu0
    %v318 = vadd.f32 %v230, %v317
    %v319 = vpop.f32.mrb[0].mxu0
    %320 = vdwg.mxu0
    %v321 = vmax.f32 %v315, 0.0
    %v322 = vmax.f32 %v318, 0.0
    %v323 = vpack.c.bf16 %v322, %v321
    %v325 = vunpack.c.l.b16 %v323
    %v326 = vunpack.c.h.b16 %v323
    %v327 = vpack.c.b16 %v325, %v325
    %v328 = vpack.c.b16 %v326, %v326
    %331 = vst [vmem:[#allocation10] sm:$0xf] %v327
    %332 = vst [vmem:[#allocation10 + $0x4] sm:$0xf] %v328
    %v333 = vld [vmem:[#allocation8] sm:$0xf]
    %v334 = vld [vmem:[#allocation8 + $0x4] sm:$0xf]
    %v335 = vld [vmem:[#allocation8 + $0x8] sm:$0xf]
    %v336 = vld [vmem:[#allocation8 + $0xc] sm:$0xf]
    %v337 = vld [vmem:[#allocation8 + $0x10] sm:$0xf]
    %v338 = vld [vmem:[#allocation8 + $0x14] sm:$0xf]
    %v339 = vld [vmem:[#allocation8 + $0x18] sm:$0xf]
    %v340 = vld [vmem:[#allocation8 + $0x1c] sm:$0xf]
    %v341 = vld [vmem:[#allocation8 + $0x20] sm:$0xf]
    %v342 = vld [vmem:[#allocation8 + $0x24] sm:$0xf]
    %v343 = vld [vmem:[#allocation8 + $0x28] sm:$0xf]
    %v344 = vld [vmem:[#allocation8 + $0x2c] sm:$0xf]
    %v345 = vld [vmem:[#allocation8 + $0x30] sm:$0xf]
    %v346 = vld [vmem:[#allocation8 + $0x34] sm:$0xf]
    %v347 = vld [vmem:[#allocation8 + $0x38] sm:$0xf]
    %v348 = vld [vmem:[#allocation8 + $0x3c] sm:$0xf]
    %v349 = vld [vmem:[%s6] sm:$0x1]
    %v351 = vlaneseq
    %v352 = vshrl.u32 %v351, 7
    %v353 = vsub.s32 0, %v352
    %v354 = vrot.slane %v349, %v353
    %v372 = vunpack.c.l.b16 %v333
    %v373 = vunpack.c.l.b16 %v334
    %v374 = vunpack.c.l.b16 %v335
    %v375 = vunpack.c.l.b16 %v336
    %v376 = vunpack.c.l.b16 %v337
    %v377 = vunpack.c.l.b16 %v338
    %v378 = vunpack.c.l.b16 %v339
    %v379 = vunpack.c.l.b16 %v340
    %v380 = vunpack.c.l.b16 %v341
    %v381 = vunpack.c.l.b16 %v342
    %v382 = vunpack.c.l.b16 %v343
    %v383 = vunpack.c.l.b16 %v344
    %v384 = vunpack.c.l.b16 %v345
    %v385 = vunpack.c.l.b16 %v346
    %v386 = vunpack.c.l.b16 %v347
    %v387 = vunpack.c.l.b16 %v348
    %v388 = vpack.c.b16 %v373, %v372
    %v389 = vpack.c.b16 %v375, %v374
    %v390 = vpack.c.b16 %v377, %v376
    %v391 = vpack.c.b16 %v379, %v378
    %v392 = vpack.c.b16 %v381, %v380
    %v393 = vpack.c.b16 %v383, %v382
    %v394 = vpack.c.b16 %v385, %v384
    %v395 = vpack.c.b16 %v387, %v386
    %404 = vmatprep.subr.bf16.mxu0 0
    %405 = vmatpush1.bf16.msra.mxu0 %v388
    %406 = vmatprep.subr.bf16.mxu0 0
    %407 = vmatpush1.bf16.msra.mxu0 %v389
    %408 = vmatprep.subr.bf16.mxu0 0
    %409 = vmatpush1.bf16.msra.mxu0 %v390
    %410 = vmatprep.subr.bf16.mxu0 0
    %411 = vmatpush1.bf16.msra.mxu0 %v391
    %412 = vmatprep.subr.bf16.mxu0 0
    %413 = vmatpush1.bf16.msra.mxu0 %v392
    %414 = vmatprep.subr.bf16.mxu0 0
    %415 = vmatpush1.bf16.msra.mxu0 %v393
    %416 = vmatprep.subr.bf16.mxu0 0
    %417 = vmatpush1.bf16.msra.mxu0 %v394
    %418 = vmatprep.subr.bf16.mxu0 0
    %419 = vmatpush1.bf16.msra.mxu0 %v395
    %420 = vmatprep.subr.bf16.mxu0 0
    %421 = vmatpush1.bf16.msra.mxu0 0
    %422 = vmatprep.subr.bf16.mxu0 0
    %423 = vmatpush1.bf16.msra.mxu0 0
    %424 = vmatprep.subr.bf16.mxu0 0
    %425 = vmatpush1.bf16.msra.mxu0 0
    %426 = vmatprep.subr.bf16.mxu0 0
    %427 = vmatpush1.bf16.msra.mxu0 0
    %428 = vmatprep.subr.bf16.mxu0 0
    %429 = vmatpush1.bf16.msra.mxu0 0
    %430 = vmatprep.subr.bf16.mxu0 0
    %431 = vmatpush1.bf16.msra.mxu0 0
    %432 = vmatprep.subr.bf16.mxu0 0
    %433 = vmatpush1.bf16.msra.mxu0 0
    %434 = vmatprep.subr.bf16.mxu0 0
    %435 = vmatpush1.bf16.msra.mxu0 0
    %436 = vmatprep.mubr.bf16.mxu0 0
    %437 = vmatmul.mubr.bf16.gmra.mrb[0].mxu0 %v323
    %v438 = vpop.f32.mrb[0].mxu0
    %v439 = vadd.f32 %v354, %v438
    %v440 = vpop.f32.mrb[0].mxu0
    %v441 = vpop.f32.mrb[0].mxu0
    %v442 = vadd.f32 %v354, %v441
    %v443 = vpop.f32.mrb[0].mxu0
    %444 = vdwg.mxu0
    %445 = vst [vmem:[#allocation11] sm:$0xff] %v439
    %446 = vst [vmem:[#allocation11 + $0x8] sm:$0xff] %v442
    // Predicated region
    $region46: #{tpu_custom_call.1} parent=1 // pred_check
      _
    $region47: #{tpu_custom_call.1} parent=1 // pred_check_branch
      %448 = sbr.rel (0) target = $region49
    $region48: #{tpu_custom_call.1} parent=1 // pred_region
      %s450 = ssub.s32 128, 128
      %451 = vsyncadd [#allocation4], %s450
      %s452 = sshll.u32 [#allocation10], 4
      %s453 = int_to_ptr.vmem [resolvable:$true] %s452
      %458 = dma.vmem_to_hbm [thread:$0]  %s453, 128, %s7, [#allocation4], 64, 64, 4
    $region49: #{tpu_custom_call.1} parent=1 // pred_fallthru
      _
    // Predicated region
    $region50: #{tpu_custom_call.1} parent=1 // pred_check
      _
    $region51: #{tpu_custom_call.1} parent=1 // pred_check_branch
      %460 = sbr.rel (0) target = $region53
    $region52: #{tpu_custom_call.1} parent=1 // pred_region
      %s462 = ssub.s32 256, 256
      %463 = vsyncadd [#allocation12], %s462
      %s464 = sshll.u32 [#allocation11], 4
      %s465 = int_to_ptr.vmem [resolvable:$true] %s464
      %470 = dma.vmem_to_hbm [thread:$0]  %s465, 256, %s8, [#allocation12], 128, 128, 8
    $region53: #{tpu_custom_call.1} parent=1 // pred_fallthru
      _
    // Predicated region
    $region54: #{tpu_custom_call.1} parent=1 // pred_check
      _
    $region55: #{tpu_custom_call.1} parent=1 // pred_check_branch
      %472 = sbr.rel (0) target = $region57
    $region56: #{tpu_custom_call.1} parent=1 // pred_region
      %473 = dma.done [#allocation4], 128
    $region57: #{tpu_custom_call.1} parent=1 // pred_fallthru
      _
    // Predicated region
    $region58: #{tpu_custom_call.1} parent=1 // pred_check
      _
    $region59: #{tpu_custom_call.1} parent=1 // pred_check_branch
      %475 = sbr.rel (0) target = $region61
    $region60: #{tpu_custom_call.1} parent=1 // pred_region
      %476 = dma.done [#allocation12], 256
    $region61: #{tpu_custom_call.1} parent=1 // pred_fallthru
      _
    %477 = vsyncpa [#allocation3], 1
    %478 = vsyncpa [#allocation6], 1
    %479 = vsyncpa [#allocation9], 1
    %480 = vsyncpa [#allocation4], 1
    %481 = vsyncpa [#allocation12], 1

</llo_original>
